<compile_context>
chip_gen: v7x
topology: tpu7x:2x2x1
jax: 0.10.0
libtpu: 0.0.40
codegen_flags: <defaults>
</compile_context>

<pallas_src>
import functools

import jax
import jax.numpy as jnp
import numpy as np
from jax.experimental import pallas as pl
from jax.experimental.pallas import tpu as pltpu


def convlstm_cell_kernel(p_ref, w_ref, b_ref, c_ref, h_out_ref, c_out_ref,
                         *, hidden):
    """One batch element per grid step.

    p_ref     : (1, Kp, M)      bf16 im2col patches (Kp = K padded to 128, M = H*W)
    w_ref     : (4*hidden, Kp)  bf16 flattened conv weight (zero-padded K tail)
    b_ref     : (4*hidden, 1)   f32 bias (broadcast over lanes)
    c_ref     : (1, hidden, M)  f32 current cell state
    h_out_ref : (1, hidden, M)
    c_out_ref : (1, hidden, M)
    """
    # Fused conv-as-matmul: (4*hidden, Kp) @ (Kp, M) -> (4*hidden, M), f32 acc.
    gates = jnp.dot(w_ref[...], p_ref[0], preferred_element_type=jnp.float32)
    gates = gates + b_ref[...]

    # Gate order (i, f, o, g) along sublanes matches PyTorch's channel split.
    ifo = jax.nn.sigmoid(gates[:3 * hidden, :])   # single wide EUP pass
    g = jnp.tanh(gates[3 * hidden:, :])

    i = ifo[:hidden, :]
    f = ifo[hidden:2 * hidden, :]
    o = ifo[2 * hidden:3 * hidden, :]

    c_next = f * c_ref[0] + i * g
    h_next = o * jnp.tanh(c_next)

    c_out_ref[0] = c_next.astype(c_out_ref.dtype)
    h_out_ref[0] = h_next.astype(h_out_ref.dtype)


def convlstm_cell(x, h_cur, c_cur, weight, bias, kernel_size):
    """ConvLSTM cell forward.  NCHW layout, same semantics as the PyTorch cell.

    x      : (B, Cin, H, W)
    h_cur  : (B, hidden, H, W)
    c_cur  : (B, hidden, H, W)
    weight : (4*hidden, Cin+hidden, KH, KW)   (PyTorch Conv2d weight layout)
    bias   : (4*hidden,)
    """
    B, Cin, H, W = x.shape
    hidden = h_cur.shape[1]
    KH, KW = kernel_size
    ph, pw = KH // 2, KW // 2
    Ctot = Cin + hidden
    K = Ctot * KH * KW
    Kp = ((K + 127) // 128) * 128          # lane-aligned contraction dim
    M = H * W
    N4 = 4 * hidden

    # im2col in channel-major layout; flat ordering (c, kh, kw) matches
    # weight.reshape(N4, K).
    combined = jnp.concatenate([x, h_cur], axis=1)                 # (B,Ctot,H,W)
    padded = jnp.pad(combined, ((0, 0), (0, 0), (ph, ph), (pw, pw)))
    taps = [padded[:, :, kh:kh + H, kw:kw + W]
            for kh in range(KH) for kw in range(KW)]               # (B,Ctot,H,W) each
    patches = jnp.stack(taps, axis=2).reshape(B, K, M)
    patches = jnp.pad(patches, ((0, 0), (0, Kp - K), (0, 0))).astype(jnp.bfloat16)

    w_flat = weight.reshape(N4, K)
    w_flat = jnp.pad(w_flat, ((0, 0), (0, Kp - K))).astype(jnp.bfloat16)
    bias2d = bias.reshape(N4, 1).astype(jnp.float32)
    c_flat = c_cur.reshape(B, hidden, M).astype(jnp.float32)

    kernel = functools.partial(convlstm_cell_kernel, hidden=hidden)

    h_flat, c_next_flat = pl.pallas_call(
        kernel,
        out_shape=(jax.ShapeDtypeStruct((B, hidden, M), x.dtype),
                   jax.ShapeDtypeStruct((B, hidden, M), x.dtype)),
        grid_spec=pltpu.PrefetchScalarGridSpec(
            num_scalar_prefetch=0,
            grid=(B,),
            in_specs=[
                pl.BlockSpec((1, Kp, M), lambda b: (b, 0, 0)),
                pl.BlockSpec((N4, Kp), lambda b: (0, 0)),
                pl.BlockSpec((N4, 1), lambda b: (0, 0)),
                pl.BlockSpec((1, hidden, M), lambda b: (b, 0, 0)),
            ],
            out_specs=[
                pl.BlockSpec((1, hidden, M), lambda b: (b, 0, 0)),
                pl.BlockSpec((1, hidden, M), lambda b: (b, 0, 0)),
            ],
        ),
        compiler_params=pltpu.CompilerParams(
            dimension_semantics=("parallel",),
            vmem_limit_bytes=32 * 1024 * 1024),
    )(patches, w_flat, bias2d, c_flat)

    return (h_flat.reshape(B, hidden, H, W),
            c_next_flat.reshape(B, hidden, H, W))


def convlstm_cell_ref(x, h_cur, c_cur, weight, bias, kernel_size):
    """Pure-JAX reference (lax conv, f32) with identical semantics."""
    combined = jnp.concatenate([x, h_cur], axis=1)
    conv = jax.lax.conv_general_dilated(
        combined, weight, window_strides=(1, 1), padding="SAME",
        dimension_numbers=("NCHW", "OIHW", "NCHW"))
    conv = conv + bias.reshape(1, -1, 1, 1)
    cc_i, cc_f, cc_o, cc_g = jnp.split(conv, 4, axis=1)
    i = jax.nn.sigmoid(cc_i)
    f = jax.nn.sigmoid(cc_f)
    o = jax.nn.sigmoid(cc_o)
    g = jnp.tanh(cc_g)
    c_next = f * c_cur + i * g
    h_next = o * jnp.tanh(c_next)
    return h_next, c_next


if __name__ == "__main__":
    # Small deterministic config: batch=2, input_dim=4, hidden_dim=32,
    # spatial 16x16, kernel_size=(3,3), bias=True.  NCHW like the PyTorch cell.
    B, Cin, hidden, H, W = 2, 4, 32, 16, 16
    KH, KW = 3, 3
    Ctot = Cin + hidden

    key = jax.random.PRNGKey(0)
    k_x, k_h, k_c, k_w, k_b = jax.random.split(key, 5)

    x = jax.random.normal(k_x, (B, Cin, H, W), jnp.float32)
    h_cur = jax.random.normal(k_h, (B, hidden, H, W), jnp.float32)
    c_cur = jax.random.normal(k_c, (B, hidden, H, W), jnp.float32)

    # Deterministic synthetic Conv2d(Cin+hidden -> 4*hidden, 3x3) parameters.
    fan_in = Ctot * KH * KW
    bound = 1.0 / np.sqrt(fan_in)
    weight = jax.random.uniform(k_w, (4 * hidden, Ctot, KH, KW), jnp.float32,
                                minval=-bound, maxval=bound)
    bias = jax.random.uniform(k_b, (4 * hidden,), jnp.float32,
                              minval=-bound, maxval=bound)

    h_next, c_next = convlstm_cell(x, h_cur, c_cur, weight, bias, (KH, KW))
    jax.block_until_ready((h_next, c_next))

    h_exp, c_exp = convlstm_cell_ref(x, h_cur, c_cur, weight, bias, (KH, KW))
    # bf16 matmul inputs (f32 accumulation) -> loosened tolerance vs f32 ref.
    np.testing.assert_allclose(np.asarray(h_next), np.asarray(h_exp),
                               rtol=2e-2, atol=2e-2)
    np.testing.assert_allclose(np.asarray(c_next), np.asarray(c_exp),
                               rtol=2e-2, atol=2e-2)

    print("KERNEL_OK")
</pallas_src>

<mosaic_0001>
module attributes {stable_mosaic.version = 11 : i64} {
  func.func @convlstm_cell_kernel(%arg0: i32, %arg1: memref<1x384x256xbf16, #tpu.memory_space<vmem>>, %arg2: memref<128x384xbf16, #tpu.memory_space<vmem>>, %arg3: memref<128x1xf32, #tpu.memory_space<vmem>>, %arg4: memref<1x32x256xf32, #tpu.memory_space<vmem>>, %arg5: memref<1x32x256xf32, #tpu.memory_space<vmem>>, %arg6: memref<1x32x256xf32, #tpu.memory_space<vmem>>) attributes {dimension_semantics = [#tpu.dimension_semantics<parallel>], iteration_bounds = array<i64: 2>, scalar_prefetch = 0 : i64, scratch_operands = 0 : i64, tpu.core_type = #tpu.core_type<tc>, window_params = [{transform_indices = @transform_0, window_bounds = array<i64: 1, 384, 256>}, {pipeline_mode = #tpu.pipeline_mode<synchronous>, transform_indices = @transform_1, window_bounds = array<i64: 128, 384>}, {pipeline_mode = #tpu.pipeline_mode<synchronous>, transform_indices = @transform_2, window_bounds = array<i64: 128, 1>}, {transform_indices = @transform_3, window_bounds = array<i64: 1, 32, 256>}, {transform_indices = @transform_4, window_bounds = array<i64: 1, 32, 256>}, {transform_indices = @transform_5, window_bounds = array<i64: 1, 32, 256>}]} {
    %c0 = arith.constant 0 : index
    %c0_0 = arith.constant 0 : index
    %0 = vector.load %arg2[%c0, %c0_0] : memref<128x384xbf16, #tpu.memory_space<vmem>>, vector<128x384xbf16>
    %c0_1 = arith.constant 0 : index
    %c0_2 = arith.constant 0 : index
    %c0_3 = arith.constant 0 : index
    %1 = vector.load %arg1[%c0_1, %c0_2, %c0_3] : memref<1x384x256xbf16, #tpu.memory_space<vmem>>, vector<1x384x256xbf16>
    %2 = vector.shape_cast %1 : vector<1x384x256xbf16> to vector<384x256xbf16>
    %cst = arith.constant dense<0.000000e+00> : vector<128x256xf32>
    %3 = tpu.matmul %0, %2, %cst {dimension_numbers = #tpu.dot_dimension_numbers<[1], [0], [0], [1], [0, 0, 1, 1], [], []>} : vector<128x384xbf16>, vector<384x256xbf16>, vector<128x256xf32> -> vector<128x256xf32>
    %c0_4 = arith.constant 0 : index
    %c0_5 = arith.constant 0 : index
    %4 = vector.load %arg3[%c0_4, %c0_5] : memref<128x1xf32, #tpu.memory_space<vmem>>, vector<128x1xf32>
    %5 = vector.broadcast %4 : vector<128x1xf32> to vector<128x256xf32>
    %6 = arith.addf %3, %5 : vector<128x256xf32>
    %7 = vector.extract_strided_slice %6 {offsets = [0, 0], sizes = [96, 256], strides = [1, 1]} : vector<128x256xf32> to vector<96x256xf32>
    %8 = arith.negf %7 : vector<96x256xf32>
    %9 = math.exp %8 : vector<96x256xf32>
    %cst_6 = arith.constant 1.000000e+00 : f32
    %10 = vector.broadcast %cst_6 : f32 to vector<96x256xf32>
    %11 = arith.addf %10, %9 : vector<96x256xf32>
    %12 = arith.divf %10, %11 : vector<96x256xf32>
    %13 = vector.extract_strided_slice %6 {offsets = [96, 0], sizes = [32, 256], strides = [1, 1]} : vector<128x256xf32> to vector<32x256xf32>
    %14 = math.tanh %13 : vector<32x256xf32>
    %15 = vector.extract_strided_slice %12 {offsets = [0, 0], sizes = [32, 256], strides = [1, 1]} : vector<96x256xf32> to vector<32x256xf32>
    %16 = vector.extract_strided_slice %12 {offsets = [32, 0], sizes = [32, 256], strides = [1, 1]} : vector<96x256xf32> to vector<32x256xf32>
    %17 = vector.extract_strided_slice %12 {offsets = [64, 0], sizes = [32, 256], strides = [1, 1]} : vector<96x256xf32> to vector<32x256xf32>
    %c0_7 = arith.constant 0 : index
    %c0_8 = arith.constant 0 : index
    %c0_9 = arith.constant 0 : index
    %18 = vector.load %arg4[%c0_7, %c0_8, %c0_9] : memref<1x32x256xf32, #tpu.memory_space<vmem>>, vector<1x32x256xf32>
    %19 = vector.shape_cast %18 : vector<1x32x256xf32> to vector<32x256xf32>
    %20 = arith.mulf %16, %19 : vector<32x256xf32>
    %21 = arith.mulf %15, %14 : vector<32x256xf32>
    %22 = arith.addf %20, %21 : vector<32x256xf32>
    %23 = math.tanh %22 : vector<32x256xf32>
    %24 = arith.mulf %17, %23 : vector<32x256xf32>
    %c0_10 = arith.constant 0 : index
    %c0_11 = arith.constant 0 : index
    %c0_12 = arith.constant 0 : index
    %25 = vector.load %arg6[%c0_10, %c0_11, %c0_12] : memref<1x32x256xf32, #tpu.memory_space<vmem>>, vector<1x32x256xf32>
    %26 = vector.shape_cast %25 : vector<1x32x256xf32> to vector<32x256xf32>
    %27 = vector.shape_cast %22 : vector<32x256xf32> to vector<1x32x256xf32>
    tpu.vector_store %arg6[%c0_10, %c0_11, %c0_12], %27 {strides = array<i32>} : memref<1x32x256xf32, #tpu.memory_space<vmem>>, vector<1x32x256xf32>,
    %c0_13 = arith.constant 0 : index
    %c0_14 = arith.constant 0 : index
    %c0_15 = arith.constant 0 : index
    %28 = vector.load %arg5[%c0_13, %c0_14, %c0_15] : memref<1x32x256xf32, #tpu.memory_space<vmem>>, vector<1x32x256xf32>
    %29 = vector.shape_cast %28 : vector<1x32x256xf32> to vector<32x256xf32>
    %30 = vector.shape_cast %24 : vector<32x256xf32> to vector<1x32x256xf32>
    tpu.vector_store %arg5[%c0_13, %c0_14, %c0_15], %30 {strides = array<i32>} : memref<1x32x256xf32, #tpu.memory_space<vmem>>, vector<1x32x256xf32>,
    return
  }
  func.func @transform_0(%arg0: i32) -> (i32, i32, i32) {
    %c0_i32 = arith.constant 0 : i32
    %c0_i32_0 = arith.constant 0 : i32
    %c0_i32_1 = arith.constant 0 : i32
    return %arg0, %c0_i32, %c0_i32_0 : i32, i32, i32
  }
  func.func @transform_1(%arg0: i32) -> (i32, i32) {
    %c0_i32 = arith.constant 0 : i32
    %c0_i32_0 = arith.constant 0 : i32
    %c0_i32_1 = arith.constant 0 : i32
    return %c0_i32, %c0_i32_0 : i32, i32
  }
  func.func @transform_2(%arg0: i32) -> (i32, i32) {
    %c0_i32 = arith.constant 0 : i32
    %c0_i32_0 = arith.constant 0 : i32
    %c0_i32_1 = arith.constant 0 : i32
    return %c0_i32, %c0_i32_0 : i32, i32
  }
  func.func @transform_3(%arg0: i32) -> (i32, i32, i32) {
    %c0_i32 = arith.constant 0 : i32
    %c0_i32_0 = arith.constant 0 : i32
    %c0_i32_1 = arith.constant 0 : i32
    return %arg0, %c0_i32, %c0_i32_0 : i32, i32, i32
  }
  func.func @transform_4(%arg0: i32) -> (i32, i32, i32) {
    %c0_i32 = arith.constant 0 : i32
    %c0_i32_0 = arith.constant 0 : i32
    %c0_i32_1 = arith.constant 0 : i32
    return %arg0, %c0_i32, %c0_i32_0 : i32, i32, i32
  }
  func.func @transform_5(%arg0: i32) -> (i32, i32, i32) {
    %c0_i32 = arith.constant 0 : i32
    %c0_i32_0 = arith.constant 0 : i32
    %c0_i32_1 = arith.constant 0 : i32
    return %arg0, %c0_i32, %c0_i32_0 : i32, i32, i32
  }
}

</mosaic_0001>

<llo_original>
// kernel: tpu_custom_call.1
$region0: #{tpu_custom_call.1}
  #allocation0 [shape = 'u32[]', space=smem, size = 0x4, offset = 0x4, fixed_abs, tag = 'smem constant byte address 0x4 - core index']
  #allocation1 [shape = 'u32[144,128]{1,0:T(1,128)}', space=vmem, size = 0x12000, scoped, tag = 'internal scratch']
  %s0 = inlined_call_operand.hbm [shape: bf16[2,384,256], index: 0, kind: input, shape index: {}]
  %s1 = inlined_call_operand.hbm [shape: bf16[128,384], index: 1, kind: input, shape index: {}]
  %s2 = inlined_call_operand.vmem [shape: f32[128,1], index: 2, kind: input, shape index: {}]
  %s3 = inlined_call_operand.vmem [shape: f32[2,32,256], index: 3, kind: input, shape index: {}]
  %s4 = inlined_call_operand.hbm [shape: f32[2,32,256], index: 4, kind: output, shape index: {0}]
  %s5 = inlined_call_operand.hbm [shape: f32[2,32,256], index: 5, kind: output, shape index: {1}]
  %6 = xla_tuple %s4, %s5
  %s7 = sld [smem:[#allocation0]]
  $region65: #{tpu_custom_call.1} parent=0
    _
  %s9 = ssub.s32 1, %s7
  %s10 = scalar_select 0, %s9, %s7
  $region1: #{tpu_custom_call.1} parent=0
    #allocation2 [shape = 'u8[393216]{0}', space=vmem, size = 0x60000, scoped, tag = 'input window, operand 0']
    #allocation3 [shape = 's32[2]{0}', space=sflag, size = 0x8, scoped, tag = 'scoped memory for tpu_custom_call.1']
    #allocation4 [shape = 's32[2]{0}', space=sflag, size = 0x8, scoped, tag = 'scoped memory for tpu_custom_call.1']
    #allocation5 [shape = 'u8[98304]{0}', space=vmem, size = 0x18000, scoped, tag = 'input window, operand 1, single buffered']
    #allocation6 [shape = 's32[1]{0}', space=sflag, size = 0x4, scoped, tag = 'scoped memory for tpu_custom_call.1']
    #allocation7 [shape = 'u8[65536]{0}', space=vmem, size = 0x10000, scoped, tag = 'output window, operand 0']
    #allocation8 [shape = 'u8[65536]{0}', space=vmem, size = 0x10000, scoped, tag = 'output window, operand 1']
    #allocation9 [shape = 's32[2]{0}', space=sflag, size = 0x8, scoped, tag = 'scoped memory for tpu_custom_call.1']
    %11 = vsyncpa [#allocation3], 0
    %s12 = scalar_lea.sflag [#allocation3], 1
    %13 = vsyncpa %s12, 0
    %14 = vsyncpa [#allocation6], 0
    %15 = vsyncpa [#allocation4], 0
    %s16 = scalar_lea.sflag [#allocation4], 1
    %17 = vsyncpa %s16, 0
    %18 = vsyncpa [#allocation9], 0
    %s19 = scalar_lea.sflag [#allocation9], 1
    %20 = vsyncpa %s19, 0
    loop: start=0, step=1, limit=4
    $region2: #{tpu_custom_call.1} parent=1 // loop_pre_header
      _
    $region3: #{tpu_custom_call.1} parent=1 // loop_header
      %s22 = sphi 0, %s26
      %p23 = scmp.ge.s32.totalorder %s22, 4
      %s32 = sphi 0, %s34
      %s35 = sphi 0, %s32
      %s36 = sphi 0, %s35
      %s52 = sphi 0, %s36
      %s56 = sphi 0, %s56
      %s58 = sphi 0, %s56
      %s59 = sphi 0, %s58
      %s73 = sphi 0, %s59
      %s77 = sphi 0, %s77
      %s79 = sphi 0, %s77
      %s80 = sphi 0, %s79
      %s94 = sphi 0, %s80
      %s100 = sphi 0, %s102
      %s103 = sphi 0, %s100
      %s104 = sphi 0, %s103
      %s120 = sphi 0, %s104
      %s126 = sphi 0, %s128
      %s129 = sphi 0, %s126
      %s130 = sphi 0, %s129
      %s146 = sphi 0, %s130
      %s152 = sphi 0, %s154
      %s155 = sphi 0, %s152
      %s156 = sphi 0, %s155
      %s172 = sphi 0, %s156
    $region4: #{tpu_custom_call.1} parent=1 // loop_header_branch
      %25 = sbr.rel (%p23) target = $region8
    $region5: #{tpu_custom_call.1} parent=1 // loop_body
      %s27 = ssub.s32 %s22, 1
      %s28 = ssub.s32 %s22, 2
      %s29 = sadd.s32 %s22, 1
      %s30 = ssub.s32 %s22, %s29
      %p31 = scmp.eq.s32.totalorder %s30, 0
      %s33 = sadd.s32 %s32, 1
      %s34 = scalar_select %p31, %s32, %s33
      %p37 = pneg %p31
      %p38 = scmp.eq.s32.totalorder %s22, 1
      %p39 = por %p37, %p38
      %p40 = scmp.ne.s32.totalorder %s32, %s35
      %p41 = scmp.eq.s32.totalorder %s22, 0
      %p42 = por %p40, %p41
      %p43 = scmp.ne.s32.totalorder %s32, %s35
      %p44 = scmp.eq.s32.totalorder %s27, 1
      %p45 = por %p43, %p44
      %p46 = scmp.ne.s32.totalorder %s35, %s36
      %p47 = scmp.eq.s32.totalorder %s27, 0
      %p48 = por %p46, %p47
      %p49 = scmp.ne.s32.totalorder %s35, %s36
      %p50 = scmp.eq.s32.totalorder %s28, 1
      %p51 = por %p49, %p50
      %p53 = scmp.ne.s32.totalorder %s36, %s52
      %p54 = scmp.eq.s32.totalorder %s28, 0
      %p55 = por %p53, %p54
      %s57 = sadd.s32 %s56, 1
      %p60 = scmp.eq.s32.totalorder %s22, 1
      %p61 = scmp.ne.s32.totalorder %s56, %s58
      %p62 = scmp.eq.s32.totalorder %s22, 0
      %p63 = por %p61, %p62
      %p64 = scmp.ne.s32.totalorder %s56, %s58
      %p65 = scmp.eq.s32.totalorder %s27, 1
      %p66 = por %p64, %p65
      %p67 = scmp.ne.s32.totalorder %s58, %s59
      %p68 = scmp.eq.s32.totalorder %s27, 0
      %p69 = por %p67, %p68
      %p70 = scmp.ne.s32.totalorder %s58, %s59
      %p71 = scmp.eq.s32.totalorder %s28, 1
      %p72 = por %p70, %p71
      %p74 = scmp.ne.s32.totalorder %s59, %s73
      %p75 = scmp.eq.s32.totalorder %s28, 0
      %p76 = por %p74, %p75
      %s78 = sadd.s32 %s77, 1
      %p81 = scmp.eq.s32.totalorder %s22, 1
      %p82 = scmp.ne.s32.totalorder %s77, %s79
      %p83 = scmp.eq.s32.totalorder %s22, 0
      %p84 = por %p82, %p83
      %p85 = scmp.ne.s32.totalorder %s77, %s79
      %p86 = scmp.eq.s32.totalorder %s27, 1
      %p87 = por %p85, %p86
      %p88 = scmp.ne.s32.totalorder %s79, %s80
      %p89 = scmp.eq.s32.totalorder %s27, 0
      %p90 = por %p88, %p89
      %p91 = scmp.ne.s32.totalorder %s79, %s80
      %p92 = scmp.eq.s32.totalorder %s28, 1
      %p93 = por %p91, %p92
      %p95 = scmp.ne.s32.totalorder %s80, %s94
      %p96 = scmp.eq.s32.totalorder %s28, 0
      %p97 = por %p95, %p96
      %s98 = ssub.s32 %s22, %s29
      %p99 = scmp.eq.s32.totalorder %s98, 0
      %s101 = sadd.s32 %s100, 1
      %s102 = scalar_select %p99, %s100, %s101
      %p105 = pneg %p99
      %p106 = scmp.eq.s32.totalorder %s22, 1
      %p107 = por %p105, %p106
      %p108 = scmp.ne.s32.totalorder %s100, %s103
      %p109 = scmp.eq.s32.totalorder %s22, 0
      %p110 = por %p108, %p109
      %p111 = scmp.ne.s32.totalorder %s100, %s103
      %p112 = scmp.eq.s32.totalorder %s27, 1
      %p113 = por %p111, %p112
      %p114 = scmp.ne.s32.totalorder %s103, %s104
      %p115 = scmp.eq.s32.totalorder %s27, 0
      %p116 = por %p114, %p115
      %p117 = scmp.ne.s32.totalorder %s103, %s104
      %p118 = scmp.eq.s32.totalorder %s28, 1
      %p119 = por %p117, %p118
      %p121 = scmp.ne.s32.totalorder %s104, %s120
      %p122 = scmp.eq.s32.totalorder %s28, 0
      %p123 = por %p121, %p122
      %s124 = ssub.s32 %s22, %s29
      %p125 = scmp.eq.s32.totalorder %s124, 0
      %s127 = sadd.s32 %s126, 1
      %s128 = scalar_select %p125, %s126, %s127
      %p131 = pneg %p125
      %p132 = scmp.eq.s32.totalorder %s22, 1
      %p133 = por %p131, %p132
      %p134 = scmp.ne.s32.totalorder %s126, %s129
      %p135 = scmp.eq.s32.totalorder %s22, 0
      %p136 = por %p134, %p135
      %p137 = scmp.ne.s32.totalorder %s126, %s129
      %p138 = scmp.eq.s32.totalorder %s27, 1
      %p139 = por %p137, %p138
      %p140 = scmp.ne.s32.totalorder %s129, %s130
      %p141 = scmp.eq.s32.totalorder %s27, 0
      %p142 = por %p140, %p141
      %p143 = scmp.ne.s32.totalorder %s129, %s130
      %p144 = scmp.eq.s32.totalorder %s28, 1
      %p145 = por %p143, %p144
      %p147 = scmp.ne.s32.totalorder %s130, %s146
      %p148 = scmp.eq.s32.totalorder %s28, 0
      %p149 = por %p147, %p148
      %s150 = ssub.s32 %s22, %s29
      %p151 = scmp.eq.s32.totalorder %s150, 0
      %s153 = sadd.s32 %s152, 1
      %s154 = scalar_select %p151, %s152, %s153
      %p157 = pneg %p151
      %p158 = scmp.eq.s32.totalorder %s22, 1
      %p159 = por %p157, %p158
      %p160 = scmp.ne.s32.totalorder %s152, %s155
      %p161 = scmp.eq.s32.totalorder %s22, 0
      %p162 = por %p160, %p161
      %p163 = scmp.ne.s32.totalorder %s152, %s155
      %p164 = scmp.eq.s32.totalorder %s27, 1
      %p165 = por %p163, %p164
      %p166 = scmp.ne.s32.totalorder %s155, %s156
      %p167 = scmp.eq.s32.totalorder %s27, 0
      %p168 = por %p166, %p167
      %p169 = scmp.ne.s32.totalorder %s155, %s156
      %p170 = scmp.eq.s32.totalorder %s28, 1
      %p171 = por %p169, %p170
      %p173 = scmp.ne.s32.totalorder %s156, %s172
      %p174 = scmp.eq.s32.totalorder %s28, 0
      %p175 = por %p173, %p174
      %p176 = scmp.le.s32.totalorder 1, %s22
      %p177 = scmp.lt.s32.totalorder %s22, 3
      %p178 = pnand %p176, %p177
      %p179 = pneg %p178
      // Predicated region
      $region9: #{tpu_custom_call.1} parent=5 // pred_check
        _
      $region10: #{tpu_custom_call.1} parent=5 // pred_check_branch
        %181 = sbr.rel (%p178) target = $region12
      $region11: #{tpu_custom_call.1} parent=5 // pred_region
        %s182 = ssub.s32 %s22, 1
        // Predicated region
        $region13: #{tpu_custom_call.1} parent=11 // pred_check
          %p183 = pneg %p69
        $region14: #{tpu_custom_call.1} parent=11 // pred_check_branch
          %185 = sbr.rel (%p183) target = $region16
        $region15: #{tpu_custom_call.1} parent=11 // pred_region
          %s187 = ssub.s32 3072, 3072
          %188 = vsyncadd [#allocation6], %s187
          %s189 = sshll.u32 [#allocation5], 4
          %s190 = int_to_ptr.vmem [resolvable:$true] %s189
          %195 = dma.hbm_to_vmem [thread:$0]  %s1, 3072, %s190, [#allocation6], 192, 192, 12
        $region16: #{tpu_custom_call.1} parent=11 // pred_fallthru
          _
        // Predicated region
        $region17: #{tpu_custom_call.1} parent=11 // pred_check
          %p196 = pneg %p90
        $region18: #{tpu_custom_call.1} parent=11 // pred_check_branch
          %198 = sbr.rel (%p196) target = $region20
        $region19: #{tpu_custom_call.1} parent=11 // pred_region
          _
        $region20: #{tpu_custom_call.1} parent=11 // pred_fallthru
          _
      $region12: #{tpu_custom_call.1} parent=5 // pred_fallthru
        _
      %p199 = scmp.lt.s32.totalorder %s22, 2
      // Predicated region
      $region21: #{tpu_custom_call.1} parent=5 // pred_check
        %p200 = pneg %p199
      $region22: #{tpu_custom_call.1} parent=5 // pred_check_branch
        %202 = sbr.rel (%p200) target = $region24
      $region23: #{tpu_custom_call.1} parent=5 // pred_region
        // Predicated region
        $region25: #{tpu_custom_call.1} parent=23 // pred_check
          %p203 = pneg %p42
        $region26: #{tpu_custom_call.1} parent=23 // pred_check_branch
          %205 = sbr.rel (%p203) target = $region28
        $region27: #{tpu_custom_call.1} parent=23 // pred_region
          %s206 = sand.u32 %s32, 1
          %s207 = scalar_lea.sflag [#allocation3], %s206
          %s208 = sand.u32 %s32, 1
          %s209 = smul.addr %s208, 384
          %s210 = scalar_lea.vmem [#allocation2], %s209
          %s212 = ssub.s32 6144, 6144
          %213 = vsyncadd %s207, %s212
          %s214 = smul.addr %s22, 96
          %s215 = smul.addr %s214, 64
          %s216 = scalar_lea.hbm %s0, %s215
          %s217 = sshll.u32 %s210, 4
          %s218 = int_to_ptr.vmem [resolvable:$true] %s217
          %223 = dma.hbm_to_vmem [thread:$0]  %s216, 6144, %s218, %s207, 128, 128, 8
        $region28: #{tpu_custom_call.1} parent=23 // pred_fallthru
          _
        // Predicated region
        $region29: #{tpu_custom_call.1} parent=23 // pred_check
          %p224 = pneg %p110
        $region30: #{tpu_custom_call.1} parent=23 // pred_check_branch
          %226 = sbr.rel (%p224) target = $region32
        $region31: #{tpu_custom_call.1} parent=23 // pred_region
          %p227 = scmp.lt.s32.totalorder %s22, 1
          %s228 = scalar_select %p227, %s22, 1
          %s229 = smul.addr %s228, 8
          %s230 = smul.addr %s229, 8
          %s231 = scalar_lea.vmem %s3, %s230
        $region32: #{tpu_custom_call.1} parent=23 // pred_fallthru
          _
      $region24: #{tpu_custom_call.1} parent=5 // pred_fallthru
        _
      %p232 = scmp.le.s32.totalorder 1, %s22
      %p233 = scmp.lt.s32.totalorder %s22, 3
      %p234 = pnand %p232, %p233
      %p235 = pneg %p234
      // Predicated region
      $region33: #{tpu_custom_call.1} parent=5 // pred_check
        _
      $region34: #{tpu_custom_call.1} parent=5 // pred_check_branch
        %237 = sbr.rel (%p234) target = $region36
      $region35: #{tpu_custom_call.1} parent=5 // pred_region
        %s238 = ssub.s32 %s22, 1
        %s239 = sand.u32 %s35, 1
        %s240 = scalar_lea.sflag [#allocation3], %s239
        %s241 = sand.u32 %s35, 1
        %s242 = smul.addr %s241, 384
        %s243 = scalar_lea.vmem [#allocation2], %s242
        // Predicated region
        $region37: #{tpu_custom_call.1} parent=35 // pred_check
          %p244 = pneg %p48
        $region38: #{tpu_custom_call.1} parent=35 // pred_check_branch
          %246 = sbr.rel (%p244) target = $region40
        $region39: #{tpu_custom_call.1} parent=35 // pred_region
          %247 = dma.done %s240, 6144
        $region40: #{tpu_custom_call.1} parent=35 // pred_fallthru
          _
        // Predicated region
        $region41: #{tpu_custom_call.1} parent=35 // pred_check
          %p248 = pneg %p69
        $region42: #{tpu_custom_call.1} parent=35 // pred_check_branch
          %250 = sbr.rel (%p248) target = $region44
        $region43: #{tpu_custom_call.1} parent=35 // pred_region
          %251 = dma.done [#allocation6], 3072
        $region44: #{tpu_custom_call.1} parent=35 // pred_fallthru
          _
        %s252 = sand.u32 %s35, 1
        %s253 = scalar_lea.sflag [#allocation3], %s252
        %s254 = sand.u32 %s35, 1
        %s255 = smul.addr %s254, 384
        %s256 = scalar_lea.vmem [#allocation2], %s255
        %p257 = pneg %p48
        %p258 = pneg %p45
        %p259 = pneg %p69
        %p260 = pneg %p66
        %p261 = pneg %p90
        %p262 = pneg %p87
        %p263 = scmp.lt.s32.totalorder %s27, 1
        %s264 = scalar_select %p263, %s27, 1
        %s265 = smul.addr %s264, 8
        %s266 = smul.addr %s265, 8
        %s267 = scalar_lea.vmem %s3, %s266
        %p268 = pneg %p116
        %p269 = pneg %p113
        %p270 = pneg %p142
        %p271 = pneg %p139
        %s272 = sand.u32 %s129, 1
        %s273 = scalar_lea.sflag [#allocation4], %s272
        %s274 = sand.u32 %s129, 1
        %s275 = smul.addr %s274, 64
        %s276 = scalar_lea.vmem [#allocation7], %s275
        %p277 = pneg %p168
        %p278 = pneg %p165
        %s279 = sand.u32 %s155, 1
        %s280 = scalar_lea.sflag [#allocation9], %s279
        %s281 = sand.u32 %s155, 1
        %s282 = smul.addr %s281, 64
        %s283 = scalar_lea.vmem [#allocation8], %s282
        %p284 = scmp.lt.s32.totalorder %s27, 1
        %s285 = scalar_select %p284, %s27, 1
        %s286 = smul.addr %s285, 8
        %s287 = smul.addr %s286, 8
        %s288 = scalar_lea.vmem %s3, %s287
        %v290 = vld [vmem:[#allocation5] sm:$0xff]
        %v291 = vld [vmem:[#allocation5 + $0x8] sm:$0xf]
        %v292 = vld [vmem:[#allocation5 + $0xc] sm:$0xff]
        %v293 = vld [vmem:[#allocation5 + $0x14] sm:$0xf]
        %v294 = vld [vmem:[#allocation5 + $0x18] sm:$0xff]
        %v295 = vld [vmem:[#allocation5 + $0x20] sm:$0xf]
        %v296 = vld [vmem:[#allocation5 + $0x24] sm:$0xff]
        %v297 = vld [vmem:[#allocation5 + $0x2c] sm:$0xf]
        %v298 = vld [vmem:[#allocation5 + $0x30] sm:$0xff]
        %v299 = vld [vmem:[#allocation5 + $0x38] sm:$0xf]
        %v300 = vld [vmem:[#allocation5 + $0x3c] sm:$0xff]
        %v301 = vld [vmem:[#allocation5 + $0x44] sm:$0xf]
        %v302 = vld [vmem:[#allocation5 + $0x48] sm:$0xff]
        %v303 = vld [vmem:[#allocation5 + $0x50] sm:$0xf]
        %v304 = vld [vmem:[#allocation5 + $0x54] sm:$0xff]
        %v305 = vld [vmem:[#allocation5 + $0x5c] sm:$0xf]
        %v306 = vld [vmem:[#allocation5 + $0x60] sm:$0xff]
        %v307 = vld [vmem:[#allocation5 + $0x68] sm:$0xf]
        %v308 = vld [vmem:[#allocation5 + $0x6c] sm:$0xff]
        %v309 = vld [vmem:[#allocation5 + $0x74] sm:$0xf]
        %v310 = vld [vmem:[#allocation5 + $0x78] sm:$0xff]
        %v311 = vld [vmem:[#allocation5 + $0x80] sm:$0xf]
        %v312 = vld [vmem:[#allocation5 + $0x84] sm:$0xff]
        %v313 = vld [vmem:[#allocation5 + $0x8c] sm:$0xf]
        %v314 = vld [vmem:[#allocation5 + $0x90] sm:$0xff]
        %v315 = vld [vmem:[#allocation5 + $0x98] sm:$0xf]
        %v316 = vld [vmem:[#allocation5 + $0x9c] sm:$0xff]
        %v317 = vld [vmem:[#allocation5 + $0xa4] sm:$0xf]
        %v318 = vld [vmem:[#allocation5 + $0xa8] sm:$0xff]
        %v319 = vld [vmem:[#allocation5 + $0xb0] sm:$0xf]
        %v320 = vld [vmem:[#allocation5 + $0xb4] sm:$0xff]
        %v321 = vld [vmem:[#allocation5 + $0xbc] sm:$0xf]
        %v322 = vld [vmem:[%s243] sm:$0xff]
        %v323 = vld [vmem:[%s243 + $0x8] sm:$0xff]
        %v324 = vld [vmem:[%s243 + $0x10] sm:$0xff]
        %v325 = vld [vmem:[%s243 + $0x18] sm:$0xff]
        %v326 = vld [vmem:[%s243 + $0x20] sm:$0xff]
        %v327 = vld [vmem:[%s243 + $0x28] sm:$0xff]
        %v328 = vld [vmem:[%s243 + $0x30] sm:$0xff]
        %v329 = vld [vmem:[%s243 + $0x38] sm:$0xff]
        %v330 = vld [vmem:[%s243 + $0x40] sm:$0xff]
        %v331 = vld [vmem:[%s243 + $0x48] sm:$0xff]
        %v332 = vld [vmem:[%s243 + $0x50] sm:$0xff]
        %v333 = vld [vmem:[%s243 + $0x58] sm:$0xff]
        %v334 = vld [vmem:[%s243 + $0x60] sm:$0xff]
        %v335 = vld [vmem:[%s243 + $0x68] sm:$0xff]
        %v336 = vld [vmem:[%s243 + $0x70] sm:$0xff]
        %v337 = vld [vmem:[%s243 + $0x78] sm:$0xff]
        %v338 = vld [vmem:[%s243 + $0x80] sm:$0xff]
        %v339 = vld [vmem:[%s243 + $0x88] sm:$0xff]
        %v340 = vld [vmem:[%s243 + $0x90] sm:$0xff]
        %v341 = vld [vmem:[%s243 + $0x98] sm:$0xff]
        %v342 = vld [vmem:[%s243 + $0xa0] sm:$0xff]
        %v343 = vld [vmem:[%s243 + $0xa8] sm:$0xff]
        %v344 = vld [vmem:[%s243 + $0xb0] sm:$0xff]
        %v345 = vld [vmem:[%s243 + $0xb8] sm:$0xff]
        %v346 = vld [vmem:[%s243 + $0xc0] sm:$0xff]
        %v347 = vld [vmem:[%s243 + $0xc8] sm:$0xff]
        %v348 = vld [vmem:[%s243 + $0xd0] sm:$0xff]
        %v349 = vld [vmem:[%s243 + $0xd8] sm:$0xff]
        %v350 = vld [vmem:[%s243 + $0xe0] sm:$0xff]
        %v351 = vld [vmem:[%s243 + $0xe8] sm:$0xff]
        %v352 = vld [vmem:[%s243 + $0xf0] sm:$0xff]
        %v353 = vld [vmem:[%s243 + $0xf8] sm:$0xff]
        %v354 = vld [vmem:[%s243 + $0x100] sm:$0xff]
        %v355 = vld [vmem:[%s243 + $0x108] sm:$0xff]
        %v356 = vld [vmem:[%s243 + $0x110] sm:$0xff]
        %v357 = vld [vmem:[%s243 + $0x118] sm:$0xff]
        %v358 = vld [vmem:[%s243 + $0x120] sm:$0xff]
        %v359 = vld [vmem:[%s243 + $0x128] sm:$0xff]
        %v360 = vld [vmem:[%s243 + $0x130] sm:$0xff]
        %v361 = vld [vmem:[%s243 + $0x138] sm:$0xff]
        %v362 = vld [vmem:[%s243 + $0x140] sm:$0xff]
        %v363 = vld [vmem:[%s243 + $0x148] sm:$0xff]
        %v364 = vld [vmem:[%s243 + $0x150] sm:$0xff]
        %v365 = vld [vmem:[%s243 + $0x158] sm:$0xff]
        %v366 = vld [vmem:[%s243 + $0x160] sm:$0xff]
        %v367 = vld [vmem:[%s243 + $0x168] sm:$0xff]
        %v368 = vld [vmem:[%s243 + $0x170] sm:$0xff]
        %v369 = vld [vmem:[%s243 + $0x178] sm:$0xff]
        %v370 = vld [vmem:[%s2] sm:$0xff]
        %v371 = vld [vmem:[%s2 + $0x8] sm:$0xff]
        %v372 = vld [vmem:[%s2 + $0x10] sm:$0xff]
        %v373 = vld [vmem:[%s2 + $0x18] sm:$0xff]
        %v374 = vld [vmem:[%s2 + $0x20] sm:$0xff]
        %v375 = vld [vmem:[%s2 + $0x28] sm:$0xff]
        %v376 = vld [vmem:[%s2 + $0x30] sm:$0xff]
        %v377 = vld [vmem:[%s2 + $0x38] sm:$0xff]
        %v378 = vld [vmem:[%s2 + $0x40] sm:$0xff]
        %v379 = vld [vmem:[%s2 + $0x48] sm:$0xff]
        %v380 = vld [vmem:[%s2 + $0x50] sm:$0xff]
        %v381 = vld [vmem:[%s2 + $0x58] sm:$0xff]
        %v382 = vld [vmem:[%s2 + $0x60] sm:$0xff]
        %v383 = vld [vmem:[%s2 + $0x68] sm:$0xff]
        %v384 = vld [vmem:[%s2 + $0x70] sm:$0xff]
        %v385 = vld [vmem:[%s2 + $0x78] sm:$0xff]
        %387 = vset.pattern.permute.xlu0 0
        %388 = vperm.xlu0 %387, %v370
        %v389 = vpop.permute.xlu0 %388
        %392 = vset.pattern.permute.xlu0 0
        %393 = vperm.xlu0 %392, %v371
        %v394 = vpop.permute.xlu0 %393
        %397 = vset.pattern.permute.xlu0 0
        %398 = vperm.xlu0 %397, %v372
        %v399 = vpop.permute.xlu0 %398
        %402 = vset.pattern.permute.xlu0 0
        %403 = vperm.xlu0 %402, %v373
        %v404 = vpop.permute.xlu0 %403
        %407 = vset.pattern.permute.xlu0 0
        %408 = vperm.xlu0 %407, %v374
        %v409 = vpop.permute.xlu0 %408
        %412 = vset.pattern.permute.xlu0 0
        %413 = vperm.xlu0 %412, %v375
        %v414 = vpop.permute.xlu0 %413
        %417 = vset.pattern.permute.xlu0 0
        %418 = vperm.xlu0 %417, %v376
        %v419 = vpop.permute.xlu0 %418
        %422 = vset.pattern.permute.xlu0 0
        %423 = vperm.xlu0 %422, %v377
        %v424 = vpop.permute.xlu0 %423
        %427 = vset.pattern.permute.xlu0 0
        %428 = vperm.xlu0 %427, %v378
        %v429 = vpop.permute.xlu0 %428
        %432 = vset.pattern.permute.xlu0 0
        %433 = vperm.xlu0 %432, %v379
        %v434 = vpop.permute.xlu0 %433
        %437 = vset.pattern.permute.xlu0 0
        %438 = vperm.xlu0 %437, %v380
        %v439 = vpop.permute.xlu0 %438
        %442 = vset.pattern.permute.xlu0 0
        %443 = vperm.xlu0 %442, %v381
        %v444 = vpop.permute.xlu0 %443
        %447 = vset.pattern.permute.xlu0 0
        %448 = vperm.xlu0 %447, %v382
        %v449 = vpop.permute.xlu0 %448
        %452 = vset.pattern.permute.xlu0 0
        %453 = vperm.xlu0 %452, %v383
        %v454 = vpop.permute.xlu0 %453
        %457 = vset.pattern.permute.xlu0 0
        %458 = vperm.xlu0 %457, %v384
        %v459 = vpop.permute.xlu0 %458
        %462 = vset.pattern.permute.xlu0 0
        %463 = vperm.xlu0 %462, %v385
        %v464 = vpop.permute.xlu0 %463
        %v498 = vunpack.c.l.b16 %v290
        %v499 = vunpack.c.h.b16 %v290
        %v500 = vunpack.c.l.b16 %v291
        %v501 = vunpack.c.l.b16 %v292
        %v502 = vunpack.c.h.b16 %v292
        %v503 = vunpack.c.l.b16 %v293
        %v504 = vunpack.c.l.b16 %v294
        %v505 = vunpack.c.h.b16 %v294
        %v506 = vunpack.c.l.b16 %v295
        %v507 = vunpack.c.l.b16 %v296
        %v508 = vunpack.c.h.b16 %v296
        %v509 = vunpack.c.l.b16 %v297
        %v510 = vunpack.c.l.b16 %v298
        %v511 = vunpack.c.h.b16 %v298
        %v512 = vunpack.c.l.b16 %v299
        %v513 = vunpack.c.l.b16 %v300
        %v514 = vunpack.c.h.b16 %v300
        %v515 = vunpack.c.l.b16 %v301
        %v516 = vunpack.c.l.b16 %v302
        %v517 = vunpack.c.h.b16 %v302
        %v518 = vunpack.c.l.b16 %v303
        %v519 = vunpack.c.l.b16 %v304
        %v520 = vunpack.c.h.b16 %v304
        %v521 = vunpack.c.l.b16 %v305
        %v522 = vunpack.c.l.b16 %v306
        %v523 = vunpack.c.h.b16 %v306
        %v524 = vunpack.c.l.b16 %v307
        %v525 = vunpack.c.l.b16 %v308
        %v526 = vunpack.c.h.b16 %v308
        %v527 = vunpack.c.l.b16 %v309
        %v528 = vunpack.c.l.b16 %v310
        %v529 = vunpack.c.h.b16 %v310
        %v530 = vunpack.c.l.b16 %v311
        %v531 = vunpack.c.l.b16 %v312
        %v532 = vunpack.c.h.b16 %v312
        %v533 = vunpack.c.l.b16 %v313
        %v534 = vunpack.c.l.b16 %v314
        %v535 = vunpack.c.h.b16 %v314
        %v536 = vunpack.c.l.b16 %v315
        %v537 = vunpack.c.l.b16 %v316
        %v538 = vunpack.c.h.b16 %v316
        %v539 = vunpack.c.l.b16 %v317
        %v540 = vunpack.c.l.b16 %v318
        %v541 = vunpack.c.h.b16 %v318
        %v542 = vunpack.c.l.b16 %v319
        %v543 = vunpack.c.l.b16 %v320
        %v544 = vunpack.c.h.b16 %v320
        %v545 = vunpack.c.l.b16 %v321
        %v546 = vpack.c.b16 %v501, %v498
        %v547 = vpack.c.b16 %v502, %v499
        %v548 = vpack.c.b16 %v503, %v500
        %v549 = vpack.c.b16 %v507, %v504
        %v550 = vpack.c.b16 %v508, %v505
        %v551 = vpack.c.b16 %v509, %v506
        %v552 = vpack.c.b16 %v513, %v510
        %v553 = vpack.c.b16 %v514, %v511
        %v554 = vpack.c.b16 %v515, %v512
        %v555 = vpack.c.b16 %v519, %v516
        %v556 = vpack.c.b16 %v520, %v517
        %v557 = vpack.c.b16 %v521, %v518
        %v558 = vpack.c.b16 %v525, %v522
        %v559 = vpack.c.b16 %v526, %v523
        %v560 = vpack.c.b16 %v527, %v524
        %v561 = vpack.c.b16 %v531, %v528
        %v562 = vpack.c.b16 %v532, %v529
        %v563 = vpack.c.b16 %v533, %v530
        %v564 = vpack.c.b16 %v537, %v534
        %v565 = vpack.c.b16 %v538, %v535
        %v566 = vpack.c.b16 %v539, %v536
        %v567 = vpack.c.b16 %v543, %v540
        %v568 = vpack.c.b16 %v544, %v541
        %v569 = vpack.c.b16 %v545, %v542
        %v642 = vunpack.c.l.b16 %v322
        %v643 = vunpack.c.h.b16 %v322
        %v644 = vunpack.c.l.b16 %v323
        %v645 = vunpack.c.h.b16 %v323
        %v646 = vunpack.c.l.b16 %v324
        %v647 = vunpack.c.h.b16 %v324
        %v648 = vunpack.c.l.b16 %v325
        %v649 = vunpack.c.h.b16 %v325
        %v650 = vunpack.c.l.b16 %v326
        %v651 = vunpack.c.h.b16 %v326
        %v652 = vunpack.c.l.b16 %v327
        %v653 = vunpack.c.h.b16 %v327
        %v654 = vunpack.c.l.b16 %v328
        %v655 = vunpack.c.h.b16 %v328
        %v656 = vunpack.c.l.b16 %v329
        %v657 = vunpack.c.h.b16 %v329
        %v658 = vunpack.c.l.b16 %v330
        %v659 = vunpack.c.h.b16 %v330
        %v660 = vunpack.c.l.b16 %v331
        %v661 = vunpack.c.h.b16 %v331
        %v662 = vunpack.c.l.b16 %v332
        %v663 = vunpack.c.h.b16 %v332
        %v664 = vunpack.c.l.b16 %v333
        %v665 = vunpack.c.h.b16 %v333
        %v666 = vunpack.c.l.b16 %v334
        %v667 = vunpack.c.h.b16 %v334
        %v668 = vunpack.c.l.b16 %v335
        %v669 = vunpack.c.h.b16 %v335
        %v670 = vunpack.c.l.b16 %v336
        %v671 = vunpack.c.h.b16 %v336
        %v672 = vunpack.c.l.b16 %v337
        %v673 = vunpack.c.h.b16 %v337
        %v674 = vunpack.c.l.b16 %v338
        %v675 = vunpack.c.h.b16 %v338
        %v676 = vunpack.c.l.b16 %v339
        %v677 = vunpack.c.h.b16 %v339
        %v678 = vunpack.c.l.b16 %v340
        %v679 = vunpack.c.h.b16 %v340
        %v680 = vunpack.c.l.b16 %v341
        %v681 = vunpack.c.h.b16 %v341
        %v682 = vunpack.c.l.b16 %v342
        %v683 = vunpack.c.h.b16 %v342
        %v684 = vunpack.c.l.b16 %v343
        %v685 = vunpack.c.h.b16 %v343
        %v686 = vunpack.c.l.b16 %v344
        %v687 = vunpack.c.h.b16 %v344
        %v688 = vunpack.c.l.b16 %v345
        %v689 = vunpack.c.h.b16 %v345
        %v690 = vunpack.c.l.b16 %v346
        %v691 = vunpack.c.h.b16 %v346
        %v692 = vunpack.c.l.b16 %v347
        %v693 = vunpack.c.h.b16 %v347
        %v694 = vunpack.c.l.b16 %v348
        %v695 = vunpack.c.h.b16 %v348
        %v696 = vunpack.c.l.b16 %v349
        %v697 = vunpack.c.h.b16 %v349
        %v698 = vunpack.c.l.b16 %v350
        %v699 = vunpack.c.h.b16 %v350
        %v700 = vunpack.c.l.b16 %v351
        %v701 = vunpack.c.h.b16 %v351
        %v702 = vunpack.c.l.b16 %v352
        %v703 = vunpack.c.h.b16 %v352
        %v704 = vunpack.c.l.b16 %v353
        %v705 = vunpack.c.h.b16 %v353
        %v706 = vunpack.c.l.b16 %v354
        %v707 = vunpack.c.h.b16 %v354
        %v708 = vunpack.c.l.b16 %v355
        %v709 = vunpack.c.h.b16 %v355
        %v710 = vunpack.c.l.b16 %v356
        %v711 = vunpack.c.h.b16 %v356
        %v712 = vunpack.c.l.b16 %v357
        %v713 = vunpack.c.h.b16 %v357
        %v714 = vunpack.c.l.b16 %v358
        %v715 = vunpack.c.h.b16 %v358
        %v716 = vunpack.c.l.b16 %v359
        %v717 = vunpack.c.h.b16 %v359
        %v718 = vunpack.c.l.b16 %v360
        %v719 = vunpack.c.h.b16 %v360
        %v720 = vunpack.c.l.b16 %v361
        %v721 = vunpack.c.h.b16 %v361
        %v722 = vunpack.c.l.b16 %v362
        %v723 = vunpack.c.h.b16 %v362
        %v724 = vunpack.c.l.b16 %v363
        %v725 = vunpack.c.h.b16 %v363
        %v726 = vunpack.c.l.b16 %v364
        %v727 = vunpack.c.h.b16 %v364
        %v728 = vunpack.c.l.b16 %v365
        %v729 = vunpack.c.h.b16 %v365
        %v730 = vunpack.c.l.b16 %v366
        %v731 = vunpack.c.h.b16 %v366
        %v732 = vunpack.c.l.b16 %v367
        %v733 = vunpack.c.h.b16 %v367
        %v734 = vunpack.c.l.b16 %v368
        %v735 = vunpack.c.h.b16 %v368
        %v736 = vunpack.c.l.b16 %v369
        %v737 = vunpack.c.h.b16 %v369
        %v738 = vpack.c.b16 %v644, %v642
        %v739 = vpack.c.b16 %v645, %v643
        %v740 = vpack.c.b16 %v648, %v646
        %v741 = vpack.c.b16 %v649, %v647
        %v742 = vpack.c.b16 %v652, %v650
        %v743 = vpack.c.b16 %v653, %v651
        %v744 = vpack.c.b16 %v656, %v654
        %v745 = vpack.c.b16 %v657, %v655
        %v746 = vpack.c.b16 %v660, %v658
        %v747 = vpack.c.b16 %v661, %v659
        %v748 = vpack.c.b16 %v664, %v662
        %v749 = vpack.c.b16 %v665, %v663
        %v750 = vpack.c.b16 %v668, %v666
        %v751 = vpack.c.b16 %v669, %v667
        %v752 = vpack.c.b16 %v672, %v670
        %v753 = vpack.c.b16 %v673, %v671
        %v754 = vpack.c.b16 %v676, %v674
        %v755 = vpack.c.b16 %v677, %v675
        %v756 = vpack.c.b16 %v680, %v678
        %v757 = vpack.c.b16 %v681, %v679
        %v758 = vpack.c.b16 %v684, %v682
        %v759 = vpack.c.b16 %v685, %v683
        %v760 = vpack.c.b16 %v688, %v686
        %v761 = vpack.c.b16 %v689, %v687
        %v762 = vpack.c.b16 %v692, %v690
        %v763 = vpack.c.b16 %v693, %v691
        %v764 = vpack.c.b16 %v696, %v694
        %v765 = vpack.c.b16 %v697, %v695
        %v766 = vpack.c.b16 %v700, %v698
        %v767 = vpack.c.b16 %v701, %v699
        %v768 = vpack.c.b16 %v704, %v702
        %v769 = vpack.c.b16 %v705, %v703
        %v770 = vpack.c.b16 %v708, %v706
        %v771 = vpack.c.b16 %v709, %v707
        %v772 = vpack.c.b16 %v712, %v710
        %v773 = vpack.c.b16 %v713, %v711
        %v774 = vpack.c.b16 %v716, %v714
        %v775 = vpack.c.b16 %v717, %v715
        %v776 = vpack.c.b16 %v720, %v718
        %v777 = vpack.c.b16 %v721, %v719
        %v778 = vpack.c.b16 %v724, %v722
        %v779 = vpack.c.b16 %v725, %v723
        %v780 = vpack.c.b16 %v728, %v726
        %v781 = vpack.c.b16 %v729, %v727
        %v782 = vpack.c.b16 %v732, %v730
        %v783 = vpack.c.b16 %v733, %v731
        %v784 = vpack.c.b16 %v736, %v734
        %v785 = vpack.c.b16 %v737, %v735
        %834 = vmatprep.subr.bf16.mxu0 %v739
        %835 = vmatpush1.bf16.msra.mxu0 %v738
        %836 = vmatprep.subr.bf16.mxu0 %v741
        %837 = vmatpush1.bf16.msra.mxu0 %v740
        %838 = vmatprep.subr.bf16.mxu0 %v743
        %839 = vmatpush1.bf16.msra.mxu0 %v742
        %840 = vmatprep.subr.bf16.mxu0 %v745
        %841 = vmatpush1.bf16.msra.mxu0 %v744
        %842 = vmatprep.subr.bf16.mxu0 %v747
        %843 = vmatpush1.bf16.msra.mxu0 %v746
        %844 = vmatprep.subr.bf16.mxu0 %v749
        %845 = vmatpush1.bf16.msra.mxu0 %v748
        %846 = vmatprep.subr.bf16.mxu0 %v751
        %847 = vmatpush1.bf16.msra.mxu0 %v750
        %848 = vmatprep.subr.bf16.mxu0 %v753
        %849 = vmatpush1.bf16.msra.mxu0 %v752
        %850 = vmatprep.subr.bf16.mxu0 %v755
        %851 = vmatpush1.bf16.msra.mxu0 %v754
        %852 = vmatprep.subr.bf16.mxu0 %v757
        %853 = vmatpush1.bf16.msra.mxu0 %v756
        %854 = vmatprep.subr.bf16.mxu0 %v759
        %855 = vmatpush1.bf16.msra.mxu0 %v758
        %856 = vmatprep.subr.bf16.mxu0 %v761
        %857 = vmatpush1.bf16.msra.mxu0 %v760
        %858 = vmatprep.subr.bf16.mxu0 %v763
        %859 = vmatpush1.bf16.msra.mxu0 %v762
        %860 = vmatprep.subr.bf16.mxu0 %v765
        %861 = vmatpush1.bf16.msra.mxu0 %v764
        %862 = vmatprep.subr.bf16.mxu0 %v767
        %863 = vmatpush1.bf16.msra.mxu0 %v766
        %864 = vmatprep.subr.bf16.mxu0 %v769
        %865 = vmatpush1.bf16.msra.mxu0 %v768
        %866 = vmatprep.mubr.bf16.mxu0 %v547
        %867 = vmatmul.mubr.bf16.gmra.mrb[0].mxu0 %v546
        %v868 = vpop.f32.mrb[0].mxu0
        %v869 = vadd.f32 %v389, %v868
        %v870 = vpop.f32.mrb[0].mxu0
        %v871 = vadd.f32 %v389, %v870
        %v872 = vpop.f32.mrb[0].mxu0
        %v873 = vadd.f32 %v394, %v872
        %v874 = vpop.f32.mrb[0].mxu0
        %v875 = vadd.f32 %v394, %v874
        %876 = vmatprep.mubr.bf16.mxu0 %v550
        %877 = vmatmul.mubr.bf16.gmra.mrb[0].mxu0 %v549
        %v878 = vpop.f32.mrb[0].mxu0
        %v879 = vadd.f32 %v399, %v878
        %v880 = vpop.f32.mrb[0].mxu0
        %v881 = vadd.f32 %v399, %v880
        %v882 = vpop.f32.mrb[0].mxu0
        %v883 = vadd.f32 %v404, %v882
        %v884 = vpop.f32.mrb[0].mxu0
        %v885 = vadd.f32 %v404, %v884
        %886 = vmatprep.mubr.bf16.mxu0 %v553
        %887 = vmatmul.mubr.bf16.gmra.mrb[0].mxu0 %v552
        %v888 = vpop.f32.mrb[0].mxu0
        %v889 = vadd.f32 %v409, %v888
        %v890 = vpop.f32.mrb[0].mxu0
        %v891 = vadd.f32 %v409, %v890
        %v892 = vpop.f32.mrb[0].mxu0
        %v893 = vadd.f32 %v414, %v892
        %v894 = vpop.f32.mrb[0].mxu0
        %v895 = vadd.f32 %v414, %v894
        %896 = vmatprep.mubr.bf16.mxu0 %v556
        %897 = vmatmul.mubr.bf16.gmra.mrb[0].mxu0 %v555
        %v898 = vpop.f32.mrb[0].mxu0
        %v899 = vadd.f32 %v419, %v898
        %v900 = vpop.f32.mrb[0].mxu0
        %v901 = vadd.f32 %v419, %v900
        %v902 = vpop.f32.mrb[0].mxu0
        %v903 = vadd.f32 %v424, %v902
        %v904 = vpop.f32.mrb[0].mxu0
        %v905 = vadd.f32 %v424, %v904
        %906 = vmatprep.mubr.bf16.mxu0 %v559
        %907 = vmatmul.mubr.bf16.gmra.mrb[0].mxu0 %v558
        %v908 = vpop.f32.mrb[0].mxu0
        %v909 = vadd.f32 %v429, %v908
        %v910 = vpop.f32.mrb[0].mxu0
        %v911 = vadd.f32 %v429, %v910
        %v912 = vpop.f32.mrb[0].mxu0
        %v913 = vadd.f32 %v434, %v912
        %v914 = vpop.f32.mrb[0].mxu0
        %v915 = vadd.f32 %v434, %v914
        %916 = vmatprep.mubr.bf16.mxu0 %v562
        %917 = vmatmul.mubr.bf16.gmra.mrb[0].mxu0 %v561
        %v918 = vpop.f32.mrb[0].mxu0
        %v919 = vadd.f32 %v439, %v918
        %v920 = vpop.f32.mrb[0].mxu0
        %v921 = vadd.f32 %v439, %v920
        %v922 = vpop.f32.mrb[0].mxu0
        %v923 = vadd.f32 %v444, %v922
        %v924 = vpop.f32.mrb[0].mxu0
        %v925 = vadd.f32 %v444, %v924
        %926 = vmatprep.mubr.bf16.mxu0 %v565
        %927 = vmatmul.mubr.bf16.gmra.mrb[0].mxu0 %v564
        %v928 = vpop.f32.mrb[0].mxu0
        %v929 = vadd.f32 %v449, %v928
        %v930 = vpop.f32.mrb[0].mxu0
        %v931 = vadd.f32 %v449, %v930
        %v932 = vpop.f32.mrb[0].mxu0
        %v933 = vadd.f32 %v454, %v932
        %v934 = vpop.f32.mrb[0].mxu0
        %v935 = vadd.f32 %v454, %v934
        %936 = vmatprep.mubr.bf16.mxu0 %v568
        %937 = vmatmul.mubr.bf16.gmra.mrb[0].mxu0 %v567
        %v938 = vpop.f32.mrb[0].mxu0
        %v939 = vadd.f32 %v459, %v938
        %v940 = vpop.f32.mrb[0].mxu0
        %v941 = vadd.f32 %v459, %v940
        %v942 = vpop.f32.mrb[0].mxu0
        %v943 = vadd.f32 %v464, %v942
        %v944 = vpop.f32.mrb[0].mxu0
        %v945 = vadd.f32 %v464, %v944
        %946 = vdwg.mxu0
        %947 = vmatprep.subr.bf16.mxu0 %v771
        %948 = vmatpush1.bf16.msra.mxu0 %v770
        %949 = vmatprep.subr.bf16.mxu0 %v773
        %950 = vmatpush1.bf16.msra.mxu0 %v772
        %951 = vmatprep.subr.bf16.mxu0 %v775
        %952 = vmatpush1.bf16.msra.mxu0 %v774
        %953 = vmatprep.subr.bf16.mxu0 %v777
        %954 = vmatpush1.bf16.msra.mxu0 %v776
        %955 = vmatprep.subr.bf16.mxu0 %v779
        %956 = vmatpush1.bf16.msra.mxu0 %v778
        %957 = vmatprep.subr.bf16.mxu0 %v781
        %958 = vmatpush1.bf16.msra.mxu0 %v780
        %959 = vmatprep.subr.bf16.mxu0 %v783
        %960 = vmatpush1.bf16.msra.mxu0 %v782
        %961 = vmatprep.subr.bf16.mxu0 %v785
        %962 = vmatpush1.bf16.msra.mxu0 %v784
        %963 = vmatprep.subr.bf16.mxu0 0
        %964 = vmatpush1.bf16.msra.mxu0 0
        %965 = vmatprep.subr.bf16.mxu0 0
        %966 = vmatpush1.bf16.msra.mxu0 0
        %967 = vmatprep.subr.bf16.mxu0 0
        %968 = vmatpush1.bf16.msra.mxu0 0
        %969 = vmatprep.subr.bf16.mxu0 0
        %970 = vmatpush1.bf16.msra.mxu0 0
        %971 = vmatprep.subr.bf16.mxu0 0
        %972 = vmatpush1.bf16.msra.mxu0 0
        %973 = vmatprep.subr.bf16.mxu0 0
        %974 = vmatpush1.bf16.msra.mxu0 0
        %975 = vmatprep.subr.bf16.mxu0 0
        %976 = vmatpush1.bf16.msra.mxu0 0
        %977 = vmatprep.subr.bf16.mxu0 0
        %978 = vmatpush1.bf16.msra.mxu0 0
        %979 = vmatprep.mubr.bf16.mxu0 0
        %980 = vmatmul.mubr.bf16.gmra.mrb[0].mxu0 %v548
        %v981 = vpop.f32.mrb[0].mxu0
        %v982 = vadd.f32 %v869, %v981
        %v983 = vpop.f32.mrb[0].mxu0
        %v984 = vadd.f32 %v871, %v983
        %v985 = vpop.f32.mrb[0].mxu0
        %v986 = vadd.f32 %v873, %v985
        %v987 = vpop.f32.mrb[0].mxu0
        %v988 = vadd.f32 %v875, %v987
        %989 = vmatprep.mubr.bf16.mxu0 0
        %990 = vmatmul.mubr.bf16.gmra.mrb[0].mxu0 %v551
        %v991 = vpop.f32.mrb[0].mxu0
        %v992 = vadd.f32 %v879, %v991
        %v993 = vpop.f32.mrb[0].mxu0
        %v994 = vadd.f32 %v881, %v993
        %v995 = vpop.f32.mrb[0].mxu0
        %v996 = vadd.f32 %v883, %v995
        %v997 = vpop.f32.mrb[0].mxu0
        %v998 = vadd.f32 %v885, %v997
        %999 = vmatprep.mubr.bf16.mxu0 0
        %1000 = vmatmul.mubr.bf16.gmra.mrb[0].mxu0 %v554
        %v1001 = vpop.f32.mrb[0].mxu0
        %v1002 = vadd.f32 %v889, %v1001
        %v1003 = vpop.f32.mrb[0].mxu0
        %v1004 = vadd.f32 %v891, %v1003
        %v1005 = vpop.f32.mrb[0].mxu0
        %v1006 = vadd.f32 %v893, %v1005
        %v1007 = vpop.f32.mrb[0].mxu0
        %v1008 = vadd.f32 %v895, %v1007
        %1009 = vmatprep.mubr.bf16.mxu0 0
        %1010 = vmatmul.mubr.bf16.gmra.mrb[0].mxu0 %v557
        %v1011 = vpop.f32.mrb[0].mxu0
        %v1012 = vadd.f32 %v899, %v1011
        %v1013 = vpop.f32.mrb[0].mxu0
        %v1014 = vadd.f32 %v901, %v1013
        %v1015 = vpop.f32.mrb[0].mxu0
        %v1016 = vadd.f32 %v903, %v1015
        %v1017 = vpop.f32.mrb[0].mxu0
        %v1018 = vadd.f32 %v905, %v1017
        %1019 = vmatprep.mubr.bf16.mxu0 0
        %1020 = vmatmul.mubr.bf16.gmra.mrb[0].mxu0 %v560
        %v1021 = vpop.f32.mrb[0].mxu0
        %v1022 = vadd.f32 %v909, %v1021
        %v1023 = vpop.f32.mrb[0].mxu0
        %v1024 = vadd.f32 %v911, %v1023
        %v1025 = vpop.f32.mrb[0].mxu0
        %v1026 = vadd.f32 %v913, %v1025
        %v1027 = vpop.f32.mrb[0].mxu0
        %v1028 = vadd.f32 %v915, %v1027
        %1029 = vmatprep.mubr.bf16.mxu0 0
        %1030 = vmatmul.mubr.bf16.gmra.mrb[0].mxu0 %v563
        %v1031 = vpop.f32.mrb[0].mxu0
        %v1032 = vadd.f32 %v919, %v1031
        %v1033 = vpop.f32.mrb[0].mxu0
        %v1034 = vadd.f32 %v921, %v1033
        %v1035 = vpop.f32.mrb[0].mxu0
        %v1036 = vadd.f32 %v923, %v1035
        %v1037 = vpop.f32.mrb[0].mxu0
        %v1038 = vadd.f32 %v925, %v1037
        %1039 = vmatprep.mubr.bf16.mxu0 0
        %1040 = vmatmul.mubr.bf16.gmra.mrb[0].mxu0 %v566
        %v1041 = vpop.f32.mrb[0].mxu0
        %v1042 = vadd.f32 %v929, %v1041
        %v1043 = vpop.f32.mrb[0].mxu0
        %v1044 = vadd.f32 %v931, %v1043
        %v1045 = vpop.f32.mrb[0].mxu0
        %v1046 = vadd.f32 %v933, %v1045
        %v1047 = vpop.f32.mrb[0].mxu0
        %v1048 = vadd.f32 %v935, %v1047
        %1049 = vmatprep.mubr.bf16.mxu0 0
        %1050 = vmatmul.mubr.bf16.gmra.mrb[0].mxu0 %v569
        %v1051 = vpop.f32.mrb[0].mxu0
        %v1052 = vadd.f32 %v939, %v1051
        %v1053 = vpop.f32.mrb[0].mxu0
        %v1054 = vadd.f32 %v941, %v1053
        %v1055 = vpop.f32.mrb[0].mxu0
        %v1056 = vadd.f32 %v943, %v1055
        %v1057 = vpop.f32.mrb[0].mxu0
        %v1058 = vadd.f32 %v945, %v1057
        %1059 = vdwg.mxu0
        %v1060 = vxor.u32 %v982, 2147483648
        %v1061 = vxor.u32 %v984, 2147483648
        %v1062 = vxor.u32 %v986, 2147483648
        %v1063 = vxor.u32 %v988, 2147483648
        %v1064 = vxor.u32 %v992, 2147483648
        %v1065 = vxor.u32 %v994, 2147483648
        %v1066 = vxor.u32 %v996, 2147483648
        %v1067 = vxor.u32 %v998, 2147483648
        %v1068 = vxor.u32 %v1002, 2147483648
        %v1069 = vxor.u32 %v1004, 2147483648
        %v1070 = vxor.u32 %v1006, 2147483648
        %v1071 = vxor.u32 %v1008, 2147483648
        %v1072 = vxor.u32 %v1012, 2147483648
        %v1073 = vxor.u32 %v1014, 2147483648
        %v1074 = vxor.u32 %v1016, 2147483648
        %v1075 = vxor.u32 %v1018, 2147483648
        %v1076 = vxor.u32 %v1022, 2147483648
        %v1077 = vxor.u32 %v1024, 2147483648
        %v1078 = vxor.u32 %v1026, 2147483648
        %v1079 = vxor.u32 %v1028, 2147483648
        %v1080 = vxor.u32 %v1032, 2147483648
        %v1081 = vxor.u32 %v1034, 2147483648
        %v1082 = vxor.u32 %v1036, 2147483648
        %v1083 = vxor.u32 %v1038, 2147483648
        %v1084 = vmul.f32 %v1060, 1.442695
        %v1085 = vpow.pop %v1084
        %v1086 = vmul.f32 %v1061, 1.442695
        %v1087 = vpow.pop %v1086
        %v1088 = vmul.f32 %v1062, 1.442695
        %v1089 = vpow.pop %v1088
        %v1090 = vmul.f32 %v1063, 1.442695
        %v1091 = vpow.pop %v1090
        %v1092 = vmul.f32 %v1064, 1.442695
        %v1093 = vpow.pop %v1092
        %v1094 = vmul.f32 %v1065, 1.442695
        %v1095 = vpow.pop %v1094
        %v1096 = vmul.f32 %v1066, 1.442695
        %v1097 = vpow.pop %v1096
        %v1098 = vmul.f32 %v1067, 1.442695
        %v1099 = vpow.pop %v1098
        %v1100 = vmul.f32 %v1068, 1.442695
        %v1101 = vpow.pop %v1100
        %v1102 = vmul.f32 %v1069, 1.442695
        %v1103 = vpow.pop %v1102
        %v1104 = vmul.f32 %v1070, 1.442695
        %v1105 = vpow.pop %v1104
        %v1106 = vmul.f32 %v1071, 1.442695
        %v1107 = vpow.pop %v1106
        %v1108 = vmul.f32 %v1072, 1.442695
        %v1109 = vpow.pop %v1108
        %v1110 = vmul.f32 %v1073, 1.442695
        %v1111 = vpow.pop %v1110
        %v1112 = vmul.f32 %v1074, 1.442695
        %v1113 = vpow.pop %v1112
        %v1114 = vmul.f32 %v1075, 1.442695
        %v1115 = vpow.pop %v1114
        %v1116 = vmul.f32 %v1076, 1.442695
        %v1117 = vpow.pop %v1116
        %v1118 = vmul.f32 %v1077, 1.442695
        %v1119 = vpow.pop %v1118
        %v1120 = vmul.f32 %v1078, 1.442695
        %v1121 = vpow.pop %v1120
        %v1122 = vmul.f32 %v1079, 1.442695
        %v1123 = vpow.pop %v1122
        %v1124 = vmul.f32 %v1080, 1.442695
        %v1125 = vpow.pop %v1124
        %v1126 = vmul.f32 %v1081, 1.442695
        %v1127 = vpow.pop %v1126
        %v1128 = vmul.f32 %v1082, 1.442695
        %v1129 = vpow.pop %v1128
        %v1130 = vmul.f32 %v1083, 1.442695
        %v1131 = vpow.pop %v1130
        %v1132 = vadd.f32 %v1085, 1.0
        %v1133 = vadd.f32 %v1087, 1.0
        %v1134 = vadd.f32 %v1089, 1.0
        %v1135 = vadd.f32 %v1091, 1.0
        %v1136 = vadd.f32 %v1093, 1.0
        %v1137 = vadd.f32 %v1095, 1.0
        %v1138 = vadd.f32 %v1097, 1.0
        %v1139 = vadd.f32 %v1099, 1.0
        %v1140 = vadd.f32 %v1101, 1.0
        %v1141 = vadd.f32 %v1103, 1.0
        %v1142 = vadd.f32 %v1105, 1.0
        %v1143 = vadd.f32 %v1107, 1.0
        %v1144 = vadd.f32 %v1109, 1.0
        %v1145 = vadd.f32 %v1111, 1.0
        %v1146 = vadd.f32 %v1113, 1.0
        %v1147 = vadd.f32 %v1115, 1.0
        %v1148 = vadd.f32 %v1117, 1.0
        %v1149 = vadd.f32 %v1119, 1.0
        %v1150 = vadd.f32 %v1121, 1.0
        %v1151 = vadd.f32 %v1123, 1.0
        %v1152 = vadd.f32 %v1125, 1.0
        %v1153 = vadd.f32 %v1127, 1.0
        %v1154 = vadd.f32 %v1129, 1.0
        %v1155 = vadd.f32 %v1131, 1.0
        %v1156 = vrcp.pop %v1132
        %v1157 = vmul.f32 1.0, %v1156
        %v1158 = vrcp.pop %v1133
        %v1159 = vmul.f32 1.0, %v1158
        %v1160 = vrcp.pop %v1134
        %v1161 = vmul.f32 1.0, %v1160
        %v1162 = vrcp.pop %v1135
        %v1163 = vmul.f32 1.0, %v1162
        %v1164 = vrcp.pop %v1136
        %v1165 = vmul.f32 1.0, %v1164
        %v1166 = vrcp.pop %v1137
        %v1167 = vmul.f32 1.0, %v1166
        %v1168 = vrcp.pop %v1138
        %v1169 = vmul.f32 1.0, %v1168
        %v1170 = vrcp.pop %v1139
        %v1171 = vmul.f32 1.0, %v1170
        %v1172 = vrcp.pop %v1140
        %v1173 = vmul.f32 1.0, %v1172
        %v1174 = vrcp.pop %v1141
        %v1175 = vmul.f32 1.0, %v1174
        %v1176 = vrcp.pop %v1142
        %v1177 = vmul.f32 1.0, %v1176
        %v1178 = vrcp.pop %v1143
        %v1179 = vmul.f32 1.0, %v1178
        %v1180 = vrcp.pop %v1144
        %v1181 = vmul.f32 1.0, %v1180
        %v1182 = vrcp.pop %v1145
        %v1183 = vmul.f32 1.0, %v1182
        %v1184 = vrcp.pop %v1146
        %v1185 = vmul.f32 1.0, %v1184
        %v1186 = vrcp.pop %v1147
        %v1187 = vmul.f32 1.0, %v1186
        %v1188 = vrcp.pop %v1148
        %v1189 = vmul.f32 1.0, %v1188
        %v1190 = vrcp.pop %v1149
        %v1191 = vmul.f32 1.0, %v1190
        %v1192 = vrcp.pop %v1150
        %v1193 = vmul.f32 1.0, %v1192
        %v1194 = vrcp.pop %v1151
        %v1195 = vmul.f32 1.0, %v1194
        %v1196 = vrcp.pop %v1152
        %v1197 = vmul.f32 1.0, %v1196
        %v1198 = vrcp.pop %v1153
        %v1199 = vmul.f32 1.0, %v1198
        %v1200 = vrcp.pop %v1154
        %v1201 = vmul.f32 1.0, %v1200
        %v1202 = vrcp.pop %v1155
        %v1203 = vmul.f32 1.0, %v1202
        %v1204 = vtanh.pop %v1042
        %v1205 = vtanh.pop %v1044
        %v1206 = vtanh.pop %v1046
        %v1207 = vtanh.pop %v1048
        %v1208 = vtanh.pop %v1052
        %v1209 = vtanh.pop %v1054
        %v1210 = vtanh.pop %v1056
        %v1211 = vtanh.pop %v1058
        %v1212 = vld [vmem:[%s288] sm:$0xff]
        %v1213 = vld [vmem:[%s288 + $0x8] sm:$0xff]
        %v1214 = vld [vmem:[%s288 + $0x10] sm:$0xff]
        %v1215 = vld [vmem:[%s288 + $0x18] sm:$0xff]
        %v1216 = vld [vmem:[%s288 + $0x20] sm:$0xff]
        %v1217 = vld [vmem:[%s288 + $0x28] sm:$0xff]
        %v1218 = vld [vmem:[%s288 + $0x30] sm:$0xff]
        %v1219 = vld [vmem:[%s288 + $0x38] sm:$0xff]
        %v1220 = vmul.f32 %v1173, %v1212
        %v1221 = vmul.f32 %v1175, %v1213
        %v1222 = vmul.f32 %v1177, %v1214
        %v1223 = vmul.f32 %v1179, %v1215
        %v1224 = vmul.f32 %v1181, %v1216
        %v1225 = vmul.f32 %v1183, %v1217
        %v1226 = vmul.f32 %v1185, %v1218
        %v1227 = vmul.f32 %v1187, %v1219
        %v1228 = vmul.f32 %v1157, %v1204
        %v1229 = vmul.f32 %v1159, %v1205
        %v1230 = vmul.f32 %v1161, %v1206
        %v1231 = vmul.f32 %v1163, %v1207
        %v1232 = vmul.f32 %v1165, %v1208
        %v1233 = vmul.f32 %v1167, %v1209
        %v1234 = vmul.f32 %v1169, %v1210
        %v1235 = vmul.f32 %v1171, %v1211
        %v1236 = vadd.f32 %v1220, %v1228
        %v1237 = vadd.f32 %v1221, %v1229
        %v1238 = vadd.f32 %v1222, %v1230
        %v1239 = vadd.f32 %v1223, %v1231
        %v1240 = vadd.f32 %v1224, %v1232
        %v1241 = vadd.f32 %v1225, %v1233
        %v1242 = vadd.f32 %v1226, %v1234
        %v1243 = vadd.f32 %v1227, %v1235
        %v1244 = vtanh.pop %v1236
        %v1245 = vtanh.pop %v1237
        %v1246 = vtanh.pop %v1238
        %v1247 = vtanh.pop %v1239
        %v1248 = vtanh.pop %v1240
        %v1249 = vtanh.pop %v1241
        %v1250 = vtanh.pop %v1242
        %v1251 = vtanh.pop %v1243
        %v1252 = vmul.f32 %v1189, %v1244
        %v1253 = vmul.f32 %v1191, %v1245
        %v1254 = vmul.f32 %v1193, %v1246
        %v1255 = vmul.f32 %v1195, %v1247
        %v1256 = vmul.f32 %v1197, %v1248
        %v1257 = vmul.f32 %v1199, %v1249
        %v1258 = vmul.f32 %v1201, %v1250
        %v1259 = vmul.f32 %v1203, %v1251
        %1260 = vst [vmem:[%s283] sm:$0xff] %v1236
        %1261 = vst [vmem:[%s283 + $0x8] sm:$0xff] %v1237
        %1262 = vst [vmem:[%s283 + $0x10] sm:$0xff] %v1238
        %1263 = vst [vmem:[%s283 + $0x18] sm:$0xff] %v1239
        %1264 = vst [vmem:[%s283 + $0x20] sm:$0xff] %v1240
        %1265 = vst [vmem:[%s283 + $0x28] sm:$0xff] %v1241
        %1266 = vst [vmem:[%s283 + $0x30] sm:$0xff] %v1242
        %1267 = vst [vmem:[%s283 + $0x38] sm:$0xff] %v1243
        %1268 = vst [vmem:[%s276] sm:$0xff] %v1252
        %1269 = vst [vmem:[%s276 + $0x8] sm:$0xff] %v1253
        %1270 = vst [vmem:[%s276 + $0x10] sm:$0xff] %v1254
        %1271 = vst [vmem:[%s276 + $0x18] sm:$0xff] %v1255
        %1272 = vst [vmem:[%s276 + $0x20] sm:$0xff] %v1256
        %1273 = vst [vmem:[%s276 + $0x28] sm:$0xff] %v1257
        %1274 = vst [vmem:[%s276 + $0x30] sm:$0xff] %v1258
        %1275 = vst [vmem:[%s276 + $0x38] sm:$0xff] %v1259
        %s1276 = sand.u32 %s129, 1
        %s1277 = scalar_lea.sflag [#allocation4], %s1276
        %s1278 = sand.u32 %s129, 1
        %s1279 = smul.addr %s1278, 64
        %s1280 = scalar_lea.vmem [#allocation7], %s1279
        %s1281 = sand.u32 %s155, 1
        %s1282 = scalar_lea.sflag [#allocation9], %s1281
        %s1283 = sand.u32 %s155, 1
        %s1284 = smul.addr %s1283, 64
        %s1285 = scalar_lea.vmem [#allocation8], %s1284
        // Predicated region
        $region45: #{tpu_custom_call.1} parent=35 // pred_check
          %p1286 = pneg %p139
        $region46: #{tpu_custom_call.1} parent=35 // pred_check_branch
          %1288 = sbr.rel (%p1286) target = $region48
        $region47: #{tpu_custom_call.1} parent=35 // pred_region
          %s1290 = ssub.s32 1024, 1024
          %1291 = vsyncadd %s1277, %s1290
          %s1292 = smul.addr %s27, 8
          %s1293 = smul.addr %s1292, 128
          %s1294 = scalar_lea.hbm %s4, %s1293
          %s1295 = sshll.u32 %s1280, 4
          %s1296 = int_to_ptr.vmem [resolvable:$true] %s1295
          %1301 = dma.vmem_to_hbm [thread:$0]  %s1296, 1024, %s1294, %s1277, 256, 256, 16
        $region48: #{tpu_custom_call.1} parent=35 // pred_fallthru
          _
        // Predicated region
        $region49: #{tpu_custom_call.1} parent=35 // pred_check
          %p1302 = pneg %p165
        $region50: #{tpu_custom_call.1} parent=35 // pred_check_branch
          %1304 = sbr.rel (%p1302) target = $region52
        $region51: #{tpu_custom_call.1} parent=35 // pred_region
          %s1306 = ssub.s32 1024, 1024
          %1307 = vsyncadd %s1282, %s1306
          %s1308 = smul.addr %s27, 8
          %s1309 = smul.addr %s1308, 128
          %s1310 = scalar_lea.hbm %s5, %s1309
          %s1311 = sshll.u32 %s1285, 4
          %s1312 = int_to_ptr.vmem [resolvable:$true] %s1311
          %1317 = dma.vmem_to_hbm [thread:$0]  %s1312, 1024, %s1310, %s1282, 256, 256, 16
        $region52: #{tpu_custom_call.1} parent=35 // pred_fallthru
          _
      $region36: #{tpu_custom_call.1} parent=5 // pred_fallthru
        _
      %p1318 = scmp.le.s32.totalorder 2, %s22
      // Predicated region
      $region53: #{tpu_custom_call.1} parent=5 // pred_check
        %p1319 = pneg %p1318
      $region54: #{tpu_custom_call.1} parent=5 // pred_check_branch
        %1321 = sbr.rel (%p1319) target = $region56
      $region55: #{tpu_custom_call.1} parent=5 // pred_region
        %s1322 = ssub.s32 %s22, 2
        // Predicated region
        $region57: #{tpu_custom_call.1} parent=55 // pred_check
          %p1323 = pneg %p145
        $region58: #{tpu_custom_call.1} parent=55 // pred_check_branch
          %1325 = sbr.rel (%p1323) target = $region60
        $region59: #{tpu_custom_call.1} parent=55 // pred_region
          %s1326 = sand.u32 %s130, 1
          %s1327 = scalar_lea.sflag [#allocation4], %s1326
          %s1328 = sand.u32 %s130, 1
          %s1329 = smul.addr %s1328, 64
          %s1330 = scalar_lea.vmem [#allocation7], %s1329
          %1331 = dma.done %s1327, 1024
        $region60: #{tpu_custom_call.1} parent=55 // pred_fallthru
          _
        // Predicated region
        $region61: #{tpu_custom_call.1} parent=55 // pred_check
          %p1332 = pneg %p171
        $region62: #{tpu_custom_call.1} parent=55 // pred_check_branch
          %1334 = sbr.rel (%p1332) target = $region64
        $region63: #{tpu_custom_call.1} parent=55 // pred_region
          %s1335 = sand.u32 %s156, 1
          %s1336 = scalar_lea.sflag [#allocation9], %s1335
          %s1337 = sand.u32 %s156, 1
          %s1338 = smul.addr %s1337, 64
          %s1339 = scalar_lea.vmem [#allocation8], %s1338
          %1340 = dma.done %s1336, 1024
        $region64: #{tpu_custom_call.1} parent=55 // pred_fallthru
          _
      $region56: #{tpu_custom_call.1} parent=5 // pred_fallthru
        _
    $region6: #{tpu_custom_call.1} parent=1 // loop_footer
      %s26 = sadd.s32 1, %s22
    $region7: #{tpu_custom_call.1} parent=1 // loop_footer_branch
      %21 = sbr.rel target = $region3
    $region8: #{tpu_custom_call.1} parent=1 // loop_exit
      _
    %1341 = vsyncpa [#allocation3], 1
    %s1342 = scalar_lea.sflag [#allocation3], 1
    %1343 = vsyncpa %s1342, 1
    %1344 = vsyncpa [#allocation6], 1
    %1345 = vsyncpa [#allocation4], 1
    %s1346 = scalar_lea.sflag [#allocation4], 1
    %1347 = vsyncpa %s1346, 1
    %1348 = vsyncpa [#allocation9], 1
    %s1349 = scalar_lea.sflag [#allocation9], 1
    %1350 = vsyncpa %s1349, 1

</llo_original>
